<compile_context>
chip_gen: v6e
topology: v6e:2x2x1
jax: 0.10.0
libtpu: 0.0.40
codegen_flags: <defaults>
</compile_context>

<pallas_src>
import functools

import jax
import jax.numpy as jnp
from jax.experimental import pallas as pl
from jax.experimental.pallas import tpu as pltpu

LANE = 128
SUBLANE = 8
_CHUNK_BYTES = 512 * 1024   # f32 staging chunk for the fused pooled-sum loop


def _cdiv(a, b):
    return (a + b - 1) // b


def _ceil_to(a, m):
    return _cdiv(a, m) * m


def _round_down(a, m):
    return (a // m) * m


@functools.lru_cache(maxsize=None)
def _chip_config():
    """Per-generation budgets: (vmem_limit, fused_budget, tile_target_bytes, num_tc)."""
    vmem_cap = 128 * 1024 * 1024
    try:
        info = pltpu.get_tpu_info()
        vmem_cap = int(getattr(info, "vmem_capacity_bytes", vmem_cap) or vmem_cap)
    except Exception:
        pass
    if vmem_cap <= 64 * 1024 * 1024:
        # v7x-like: 64 MiB VMEM per TensorCore, 2 TCs/chip, ~3.2 TB/s HBM.
        # Bigger S tiles amortize the ~0.35 us/step overhead at the higher bandwidth.
        return 48 * 1024 * 1024, 28 * 1024 * 1024, 6 * 1024 * 1024, 2
    # v5e / v6e: 128 MiB VMEM, 1 TC/chip. A larger fused budget keeps medium
    # volumes on the 1R+1W fused path (vs the 2R+1W two-phase path).
    return 96 * 1024 * 1024, 56 * 1024 * 1024, 4 * 1024 * 1024, 1


def _gate_from_pooled(pooled, w1, b1, w2, b2):
    """pooled: (C, 1) f32. Returns the sigmoid gate of shape (C, 1) f32."""
    c = w2.shape[0]
    if c >= 128:
        # Realistic channel counts: run the two tiny FCs on the MXU.
        hidden = jnp.dot(w1.astype(jnp.float32), pooled,
                         preferred_element_type=jnp.float32) + b1
        hidden = jnp.maximum(hidden, 0.0)
        logits = jnp.dot(w2.astype(jnp.float32), hidden,
                         preferred_element_type=jnp.float32) + b2
    else:
        # Tiny channel counts: broadcast-multiply + reduce (VPU/XLU) avoids MXU padding.
        hidden = jnp.sum(w1 * pooled.T, axis=-1, keepdims=True) + b1      # (C/2, 1)
        hidden = jnp.maximum(hidden, 0.0)
        logits = jnp.sum(w2 * hidden.T, axis=-1, keepdims=True) + b2      # (C, 1)
    return jax.nn.sigmoid(logits)


# --------------------------------------------------------------------------------------
# Fused single-pass kernel (one batch element per grid step): 1 HBM read + 1 write of x.
# --------------------------------------------------------------------------------------
def _fr_fused_kernel(x_ref, w1_ref, b1_ref, w2_ref, b2_ref, o_ref, acc_ref,
                     *, inv_s, chunk_sub, n_full, rem_sub):
    # x_ref/o_ref: (C, s_sub, 128); acc_ref: (C, 128) f32 scratch.
    acc_ref[...] = jnp.zeros_like(acc_ref)

    # Chunked pooled-sum: only a (C, chunk_sub, 128) f32 staging temp at a time
    # (no full-slab f32 cast), accumulated into a lane-dense f32 partial.
    if n_full > 0:
        @pl.loop(0, n_full)
        def _(i):
            start = pl.multiple_of(i * chunk_sub, chunk_sub)
            xi = x_ref[:, pl.ds(start, chunk_sub), :].astype(jnp.float32)
            acc_ref[...] += jnp.sum(xi, axis=1)
    if rem_sub > 0:
        xt = x_ref[:, pl.ds(n_full * chunk_sub, rem_sub), :].astype(jnp.float32)
        acc_ref[...] += jnp.sum(xt, axis=1)

    # Single cross-lane reduce, then the tiny gate FCs. Padded tail elements (if
    # any) are zeros in HBM, so they contribute nothing to the sum; divide by the
    # true spatial size S via inv_s.
    pooled = jnp.sum(acc_ref[...], axis=-1, keepdims=True) * inv_s        # (C, 1)
    gate = _gate_from_pooled(pooled, w1_ref[...], b1_ref[...], w2_ref[...], b2_ref[...])

    # Dominant elementwise multiply stays in the native dtype (gate cast once).
    gate_x = gate.astype(x_ref.dtype)
    o_ref[...] = (x_ref[...] * gate_x[:, :, None]).astype(o_ref.dtype)


# --------------------------------------------------------------------------------------
# Two-phase path, phase 1: S-tiled pooled mean (reduction axis last, "arbitrary").
# --------------------------------------------------------------------------------------
def _fr_pool_kernel(x_ref, pooled_ref, acc_ref, *, inv_s, tile_sub, last_rows):
    # x_ref: (C, tile_sub, 128); pooled_ref: (C, 1) f32; acc_ref: (C, 128) f32 scratch.
    s = pl.program_id(1)
    n_s = pl.num_programs(1)

    @pl.when(s == 0)
    def _():
        acc_ref[...] = jnp.zeros_like(acc_ref)

    x32 = x_ref[...].astype(jnp.float32)
    if last_rows != tile_sub:
        # Ragged final S tile: sublane rows >= last_rows of the last block are
        # out-of-bounds reads (contents undefined) — mask them out of the sum.
        valid = jnp.where(s == n_s - 1, last_rows, tile_sub)
        rows = jax.lax.broadcasted_iota(jnp.int32, (tile_sub, LANE), 0)
        x32 = jnp.where((rows < valid)[None, :, :], x32, 0.0)

    # Lane-dense accumulator: sublane-only reduce per tile (cheap, co-issues with
    # loads); the single cross-lane XLU reduce happens once in the finalize below.
    acc_ref[...] += jnp.sum(x32, axis=1)

    @pl.when(s == n_s - 1)
    def _():
        sums = jnp.sum(acc_ref[...], axis=-1, keepdims=True)              # (C, 1)
        pooled_ref[...] = sums * inv_s


# --------------------------------------------------------------------------------------
# Two-phase path, phase 2: S-tiled elementwise recalibration (fully parallel grid).
# --------------------------------------------------------------------------------------
def _fr_scale_kernel(x_ref, gate_ref, o_ref):
    # x_ref/o_ref: (C, tile_sub, 128); gate_ref: (C, 1) f32.
    gate = gate_ref[...].astype(x_ref.dtype)
    o_ref[...] = (x_ref[...] * gate[:, :, None]).astype(o_ref.dtype)


@functools.partial(jax.jit,
                   static_argnames=("force_two_phase", "s_tile_sublanes", "donate_x"))
def feature_recalibration(x, w1, b1, w2, b2, *, force_two_phase=False,
                          s_tile_sublanes=None, donate_x=False):
    """x: (N, C, D, H, W); w1: (C//2, C); b1: (C//2,); w2: (C, C//2); b2: (C,)."""
    N, C, D, H, W = x.shape
    S = D * H * W
    dtype = x.dtype
    itemsize = jnp.dtype(dtype).itemsize
    vmem_limit, fused_budget, tile_target_bytes, num_tc = _chip_config()

    inv_s = 1.0 / float(S)
    b1_col = b1.reshape(-1, 1)
    b2_col = b2.reshape(-1, 1)

    # Retile the flattened spatial axis to (s_sub, 128) so every block is lane-dense
    # regardless of the (often tiny) channel count. Pad only to a multiple of 128
    # (required by the reshape); this copy exists only when S % 128 != 0.
    s_pad = _ceil_to(S, LANE)
    s_sub = s_pad // LANE
    padded = s_pad != S
    x_flat = x.reshape(N, C, S)
    if padded:
        x_flat = jnp.pad(x_flat, ((0, 0), (0, 0), (0, s_pad - S)))
    x_tiled = x_flat.reshape(N, C, s_sub, LANE)

    # Alias x with the output when safe/requested: always when a padded intermediate
    # was created (it is dead after the call); otherwise only if the caller donates x.
    alias = {0: 0} if (donate_x or padded) else {}

    # f32 staging chunk for the fused pooled-sum loop.
    chunk_sub = max(SUBLANE, _round_down(_CHUNK_BYTES // (C * LANE * 4), SUBLANE))
    chunk_sub = min(chunk_sub, _ceil_to(s_sub, SUBLANE))
    n_full = s_sub // chunk_sub
    rem_sub = s_sub - n_full * chunk_sub

    # Honest per-step VMEM footprint of the fused path: double-buffered x + out
    # blocks, the f32 pooling staging chunk, the lane-dense accumulator, weights.
    fused_step_bytes = (4 * C * s_pad * itemsize
                        + C * chunk_sub * LANE * 4
                        + C * LANE * 4
                        + 2 * (C * (C // 2) + C + C // 2) * 4)

    # On 2-TC chips (v7x-like), a fused grid of (N,) with N < 2 leaves a TensorCore
    # idle; prefer the two-phase path (its phase-2 grid is fully parallel) unless
    # the volume is tiny enough that per-kernel overhead dominates anyway.
    per_batch_bytes = C * S * itemsize
    needs_dual_tc = (num_tc > 1) and (N < num_tc) and (per_batch_bytes >= (4 << 20))

    use_fused = (not force_two_phase) and (fused_step_bytes <= fused_budget) \
        and (not needs_dual_tc)

    if use_fused:
        # --- Fused single-pass kernel: one batch element per grid step. ---
        kernel = functools.partial(_fr_fused_kernel, inv_s=inv_s,
                                   chunk_sub=chunk_sub, n_full=n_full, rem_sub=rem_sub)
        out_tiled = pl.pallas_call(
            kernel,
            out_shape=jax.ShapeDtypeStruct((N, C, s_sub, LANE), dtype),
            grid_spec=pltpu.PrefetchScalarGridSpec(
                num_scalar_prefetch=0,
                grid=(N,),
                in_specs=[
                    pl.BlockSpec((None, C, s_sub, LANE), lambda n: (n, 0, 0, 0)),
                    pl.BlockSpec((C // 2, C), lambda n: (0, 0)),
                    pl.BlockSpec((C // 2, 1), lambda n: (0, 0)),
                    pl.BlockSpec((C, C // 2), lambda n: (0, 0)),
                    pl.BlockSpec((C, 1), lambda n: (0, 0)),
                ],
                out_specs=pl.BlockSpec((None, C, s_sub, LANE), lambda n: (n, 0, 0, 0)),
                scratch_shapes=[pltpu.VMEM((C, LANE), jnp.float32)],
            ),
            compiler_params=pltpu.CompilerParams(
                dimension_semantics=("parallel",),
                vmem_limit_bytes=vmem_limit,
            ),
            input_output_aliases=alias,
        )(x_tiled, w1, b1_col, w2, b2_col)
    else:
        # --- Two-phase path: S-tiled pooled mean, XLA gate FCs (batched over N),
        #     then an S-tiled elementwise multiply. ---
        if s_tile_sublanes is not None:
            tile_sub = max(SUBLANE, (int(s_tile_sublanes) // SUBLANE) * SUBLANE)
        else:
            tile_sub = max(SUBLANE,
                           _round_down(tile_target_bytes // (C * LANE * itemsize), SUBLANE))
        tile_sub = min(tile_sub, _ceil_to(s_sub, SUBLANE))
        n_s_tiles = _cdiv(s_sub, tile_sub)
        last_rows = s_sub - (n_s_tiles - 1) * tile_sub   # valid sublane rows in last tile

        # Phase 1: global average pool per batch element (S axis is the reduction).
        pool_kernel = functools.partial(_fr_pool_kernel, inv_s=inv_s,
                                        tile_sub=tile_sub, last_rows=last_rows)
        pooled = pl.pallas_call(
            pool_kernel,
            out_shape=jax.ShapeDtypeStruct((N, C, 1), jnp.float32),
            grid_spec=pltpu.PrefetchScalarGridSpec(
                num_scalar_prefetch=0,
                grid=(N, n_s_tiles),
                in_specs=[pl.BlockSpec((None, C, tile_sub, LANE), lambda n, s: (n, 0, s, 0))],
                out_specs=pl.BlockSpec((None, C, 1), lambda n, s: (n, 0, 0)),
                scratch_shapes=[pltpu.VMEM((C, LANE), jnp.float32)],
            ),
            compiler_params=pltpu.CompilerParams(
                dimension_semantics=("parallel", "arbitrary"),
                vmem_limit_bytes=vmem_limit,
            ),
        )(x_tiled)

        # Gate FCs once for all N batches (tiny (N,C)x(C,C/2) matmuls) in plain XLA.
        pooled2d = pooled[:, :, 0].astype(jnp.float32)                     # (N, C)
        h = jnp.maximum(pooled2d @ w1.astype(jnp.float32).T
                        + b1.astype(jnp.float32), 0.0)                     # (N, C/2)
        g = jax.nn.sigmoid(h @ w2.astype(jnp.float32).T
                           + b2.astype(jnp.float32))                       # (N, C)
        gate = g[:, :, None]                                               # (N, C, 1) f32

        # Phase 2: lane-dense tiled elementwise recalibration (both axes parallel).
        out_tiled = pl.pallas_call(
            _fr_scale_kernel,
            out_shape=jax.ShapeDtypeStruct((N, C, s_sub, LANE), dtype),
            grid_spec=pltpu.PrefetchScalarGridSpec(
                num_scalar_prefetch=0,
                grid=(N, n_s_tiles),
                in_specs=[
                    pl.BlockSpec((None, C, tile_sub, LANE), lambda n, s: (n, 0, s, 0)),
                    pl.BlockSpec((None, C, 1), lambda n, s: (n, 0, 0)),
                ],
                out_specs=pl.BlockSpec((None, C, tile_sub, LANE), lambda n, s: (n, 0, s, 0)),
            ),
            compiler_params=pltpu.CompilerParams(
                dimension_semantics=("parallel", "parallel"),
                vmem_limit_bytes=vmem_limit,
            ),
            input_output_aliases=alias,
        )(x_tiled, gate)

    out_flat = out_tiled.reshape(N, C, s_pad)
    if padded:
        out_flat = out_flat[:, :, :S]
    return out_flat.reshape(N, C, D, H, W)


def _reference(x, w1, b1, w2, b2):
    # Pure-JAX reference matching the PyTorch semantics.
    pooled = jnp.mean(x, axis=(2, 3, 4))                               # (N, C)
    h = jnp.maximum(pooled @ w1.T + b1, 0.0)                           # (N, C/2)
    g = jax.nn.sigmoid(h @ w2.T + b2)                                  # (N, C)
    return x * g[:, :, None, None, None]


if __name__ == "__main__":
    key = jax.random.PRNGKey(0)
    N, C, D, H, W = 2, 4, 16, 16, 16
    k_x, k_w1, k_b1, k_w2, k_b2 = jax.random.split(key, 5)

    x = jax.random.normal(k_x, (N, C, D, H, W), dtype=jnp.float32)
    # Conv3d with 1x1x1 kernels == dense layers over channels.
    w1 = jax.random.normal(k_w1, (C // 2, C), dtype=jnp.float32) * 0.5
    b1 = jax.random.normal(k_b1, (C // 2,), dtype=jnp.float32) * 0.1
    w2 = jax.random.normal(k_w2, (C, C // 2), dtype=jnp.float32) * 0.5
    b2 = jax.random.normal(k_b2, (C,), dtype=jnp.float32) * 0.1

    ref = _reference(x, w1, b1, w2, b2)

    # Fused single-pass path (small volume: slab fits the per-chip fused budget).
    out = jax.block_until_ready(feature_recalibration(x, w1, b1, w2, b2))
    assert out.shape == (N, C, D, H, W)
    assert jnp.allclose(out, ref, atol=1e-5, rtol=1e-5)

    # Two-phase (S-tiled) path, forced with a small tile so the pooled-sum
    # accumulator + pl.when finalize runs over multiple S tiles.
    out2 = jax.block_until_ready(
        feature_recalibration(x, w1, b1, w2, b2, force_two_phase=True, s_tile_sublanes=8))
    assert jnp.allclose(out2, ref, atol=1e-5, rtol=1e-5)

    # Ragged spatial size (S % 128 != 0): exercises minimal pad/crop, in-kernel
    # masking of the partial S tile, and automatic x<->out aliasing of the padded temp.
    Dr, Hr, Wr = 6, 10, 9                                   # S = 540 -> s_sub = 5
    xr = jax.random.normal(k_x, (N, C, Dr, Hr, Wr), dtype=jnp.float32)
    refr = _reference(xr, w1, b1, w2, b2)
    outr = jax.block_until_ready(feature_recalibration(xr, w1, b1, w2, b2))
    assert jnp.allclose(outr, refr, atol=1e-5, rtol=1e-5)
    outr2 = jax.block_until_ready(
        feature_recalibration(xr, w1, b1, w2, b2, force_two_phase=True, s_tile_sublanes=8))
    assert jnp.allclose(outr2, refr, atol=1e-5, rtol=1e-5)

    # Multi-tile ragged reduction: s_sub = 20 rows, tile = 8 -> last tile has 4 valid rows.
    Dm, Hm, Wm = 16, 16, 10                                 # S = 2560 (multiple of 128)
    xm = jax.random.normal(k_x, (N, C, Dm, Hm, Wm), dtype=jnp.float32)
    refm = _reference(xm, w1, b1, w2, b2)
    outm = jax.block_until_ready(
        feature_recalibration(xm, w1, b1, w2, b2, force_two_phase=True, s_tile_sublanes=8))
    assert jnp.allclose(outm, refm, atol=1e-5, rtol=1e-5)

    print("KERNEL_OK")
</pallas_src>

<mosaic_0001>
module attributes {stable_mosaic.version = 11 : i64} {
  func.func @_fr_fused_kernel(%arg0: i32, %arg1: memref<1x4x32x128xf32, #tpu.memory_space<vmem>>, %arg2: memref<2x4xf32, #tpu.memory_space<vmem>>, %arg3: memref<2x1xf32, #tpu.memory_space<vmem>>, %arg4: memref<4x2xf32, #tpu.memory_space<vmem>>, %arg5: memref<4x1xf32, #tpu.memory_space<vmem>>, %arg6: memref<1x4x32x128xf32, #tpu.memory_space<vmem>>, %arg7: memref<4x128xf32, #tpu.memory_space<vmem>>) attributes {dimension_semantics = [#tpu.dimension_semantics<parallel>], iteration_bounds = array<i64: 2>, scalar_prefetch = 0 : i64, scratch_operands = 1 : i64, tpu.core_type = #tpu.core_type<tc>, window_params = [{transform_indices = @transform_0, window_bounds = array<i64: 1, 4, 32, 128>}, {pipeline_mode = #tpu.pipeline_mode<synchronous>, transform_indices = @transform_1, window_bounds = array<i64: 2, 4>}, {pipeline_mode = #tpu.pipeline_mode<synchronous>, transform_indices = @transform_2, window_bounds = array<i64: 2, 1>}, {pipeline_mode = #tpu.pipeline_mode<synchronous>, transform_indices = @transform_3, window_bounds = array<i64: 4, 2>}, {pipeline_mode = #tpu.pipeline_mode<synchronous>, transform_indices = @transform_4, window_bounds = array<i64: 4, 1>}, {transform_indices = @transform_5, window_bounds = array<i64: 1, 4, 32, 128>}]} {
    %cst = arith.constant 0.000000e+00 : f32
    %0 = vector.broadcast %cst : f32 to vector<4x128xf32>
    %c0 = arith.constant 0 : index
    %c0_0 = arith.constant 0 : index
    %1 = vector.load %arg7[%c0, %c0_0] : memref<4x128xf32, #tpu.memory_space<vmem>>, vector<4x128xf32>
    tpu.vector_store %arg7[%c0, %c0_0], %0 {strides = array<i32>} : memref<4x128xf32, #tpu.memory_space<vmem>>, vector<4x128xf32>,
    %c0_i32 = arith.constant 0 : i32
    %c1_i32 = arith.constant 1 : i32
    %2 = arith.muli %c0_i32, %c1_i32 : i32
    %c0_i32_1 = arith.constant 0 : i32
    %3 = arith.addi %c0_i32_1, %2 : i32
    %c32_i32 = arith.constant 32 : i32
    %4 = arith.muli %3, %c32_i32 : i32
    %5 = tpu.assume_multiple %4, 32 : i32
    %c0_2 = arith.constant 0 : index
    %c0_3 = arith.constant 0 : index
    %6 = arith.index_cast %5 : i32 to index
    %c0_4 = arith.constant 0 : index
    %7 = vector.load %arg1[%c0_2, %c0_3, %6, %c0_4] : memref<1x4x32x128xf32, #tpu.memory_space<vmem>>, vector<1x4x32x128xf32>
    %8 = vector.shape_cast %7 : vector<1x4x32x128xf32> to vector<4x32x128xf32>
    %c0_5 = arith.constant 0 : index
    %c0_6 = arith.constant 0 : index
    %9 = vector.load %arg7[%c0_5, %c0_6] : memref<4x128xf32, #tpu.memory_space<vmem>>, vector<4x128xf32>
    %cst_7 = arith.constant dense<0.000000e+00> : vector<4x128xf32>
    %10 = vector.multi_reduction <add>, %8, %cst_7 [1] : vector<4x32x128xf32> to vector<4x128xf32>
    %11 = arith.addf %9, %10 : vector<4x128xf32>
    %c0_8 = arith.constant 0 : index
    %c0_9 = arith.constant 0 : index
    %12 = vector.load %arg7[%c0_8, %c0_9] : memref<4x128xf32, #tpu.memory_space<vmem>>, vector<4x128xf32>
    tpu.vector_store %arg7[%c0_8, %c0_9], %11 {strides = array<i32>} : memref<4x128xf32, #tpu.memory_space<vmem>>, vector<4x128xf32>,
    %c1_i32_10 = arith.constant 1 : i32
    %c0_11 = arith.constant 0 : index
    %c0_12 = arith.constant 0 : index
    %13 = vector.load %arg7[%c0_11, %c0_12] : memref<4x128xf32, #tpu.memory_space<vmem>>, vector<4x128xf32>
    %cst_13 = arith.constant dense<0.000000e+00> : vector<4xf32>
    %14 = vector.multi_reduction <add>, %13, %cst_13 [1] : vector<4x128xf32> to vector<4xf32>
    %15 = vector.shape_cast %14 : vector<4xf32> to vector<4x1xf32>
    %cst_14 = arith.constant 2.44140625E-4 : f32
    %16 = vector.broadcast %cst_14 : f32 to vector<4x1xf32>
    %17 = arith.mulf %15, %16 : vector<4x1xf32>
    %c0_15 = arith.constant 0 : index
    %c0_16 = arith.constant 0 : index
    %18 = vector.load %arg2[%c0_15, %c0_16] : memref<2x4xf32, #tpu.memory_space<vmem>>, vector<2x4xf32>
    %c0_17 = arith.constant 0 : index
    %c0_18 = arith.constant 0 : index
    %19 = vector.load %arg3[%c0_17, %c0_18] : memref<2x1xf32, #tpu.memory_space<vmem>>, vector<2x1xf32>
    %c0_19 = arith.constant 0 : index
    %c0_20 = arith.constant 0 : index
    %20 = vector.load %arg4[%c0_19, %c0_20] : memref<4x2xf32, #tpu.memory_space<vmem>>, vector<4x2xf32>
    %c0_21 = arith.constant 0 : index
    %c0_22 = arith.constant 0 : index
    %21 = vector.load %arg5[%c0_21, %c0_22] : memref<4x1xf32, #tpu.memory_space<vmem>>, vector<4x1xf32>
    %22 = tpu.transpose %17, [1, 0] : vector<4x1xf32> -> vector<1x4xf32>
    %23 = vector.broadcast %22 : vector<1x4xf32> to vector<2x4xf32>
    %24 = arith.mulf %18, %23 : vector<2x4xf32>
    %cst_23 = arith.constant dense<0.000000e+00> : vector<2xf32>
    %25 = vector.multi_reduction <add>, %24, %cst_23 [1] : vector<2x4xf32> to vector<2xf32>
    %26 = vector.shape_cast %25 : vector<2xf32> to vector<2x1xf32>
    %27 = arith.addf %26, %19 : vector<2x1xf32>
    %cst_24 = arith.constant 0.000000e+00 : f32
    %28 = vector.broadcast %cst_24 : f32 to vector<2x1xf32>
    %29 = arith.maximumf %27, %28 : vector<2x1xf32>
    %30 = tpu.transpose %29, [1, 0] : vector<2x1xf32> -> vector<1x2xf32>
    %31 = vector.broadcast %30 : vector<1x2xf32> to vector<4x2xf32>
    %32 = arith.mulf %20, %31 : vector<4x2xf32>
    %cst_25 = arith.constant dense<0.000000e+00> : vector<4xf32>
    %33 = vector.multi_reduction <add>, %32, %cst_25 [1] : vector<4x2xf32> to vector<4xf32>
    %34 = vector.shape_cast %33 : vector<4xf32> to vector<4x1xf32>
    %35 = arith.addf %34, %21 : vector<4x1xf32>
    %36 = arith.negf %35 : vector<4x1xf32>
    %37 = math.exp %36 : vector<4x1xf32>
    %cst_26 = arith.constant 1.000000e+00 : f32
    %38 = vector.broadcast %cst_26 : f32 to vector<4x1xf32>
    %39 = arith.addf %38, %37 : vector<4x1xf32>
    %40 = arith.divf %38, %39 : vector<4x1xf32>
    %c0_27 = arith.constant 0 : index
    %c0_28 = arith.constant 0 : index
    %c0_29 = arith.constant 0 : index
    %c0_30 = arith.constant 0 : index
    %41 = vector.load %arg1[%c0_27, %c0_28, %c0_29, %c0_30] : memref<1x4x32x128xf32, #tpu.memory_space<vmem>>, vector<1x4x32x128xf32>
    %42 = vector.shape_cast %41 : vector<1x4x32x128xf32> to vector<4x32x128xf32>
    %43 = vector.shape_cast %40 : vector<4x1xf32> to vector<4x1x1xf32>
    %44 = vector.broadcast %43 : vector<4x1x1xf32> to vector<4x32x128xf32>
    %45 = arith.mulf %42, %44 : vector<4x32x128xf32>
    %c0_31 = arith.constant 0 : index
    %c0_32 = arith.constant 0 : index
    %c0_33 = arith.constant 0 : index
    %c0_34 = arith.constant 0 : index
    %46 = vector.load %arg6[%c0_31, %c0_32, %c0_33, %c0_34] : memref<1x4x32x128xf32, #tpu.memory_space<vmem>>, vector<1x4x32x128xf32>
    %47 = vector.shape_cast %46 : vector<1x4x32x128xf32> to vector<4x32x128xf32>
    %48 = vector.shape_cast %45 : vector<4x32x128xf32> to vector<1x4x32x128xf32>
    tpu.vector_store %arg6[%c0_31, %c0_32, %c0_33, %c0_34], %48 {strides = array<i32>} : memref<1x4x32x128xf32, #tpu.memory_space<vmem>>, vector<1x4x32x128xf32>,
    return
  }
  func.func @transform_0(%arg0: i32) -> (i32, i32, i32, i32) {
    %c0_i32 = arith.constant 0 : i32
    %c0_i32_0 = arith.constant 0 : i32
    %c0_i32_1 = arith.constant 0 : i32
    %c0_i32_2 = arith.constant 0 : i32
    return %arg0, %c0_i32, %c0_i32_0, %c0_i32_1 : i32, i32, i32, i32
  }
  func.func @transform_1(%arg0: i32) -> (i32, i32) {
    %c0_i32 = arith.constant 0 : i32
    %c0_i32_0 = arith.constant 0 : i32
    %c0_i32_1 = arith.constant 0 : i32
    return %c0_i32, %c0_i32_0 : i32, i32
  }
  func.func @transform_2(%arg0: i32) -> (i32, i32) {
    %c0_i32 = arith.constant 0 : i32
    %c0_i32_0 = arith.constant 0 : i32
    %c0_i32_1 = arith.constant 0 : i32
    return %c0_i32, %c0_i32_0 : i32, i32
  }
  func.func @transform_3(%arg0: i32) -> (i32, i32) {
    %c0_i32 = arith.constant 0 : i32
    %c0_i32_0 = arith.constant 0 : i32
    %c0_i32_1 = arith.constant 0 : i32
    return %c0_i32, %c0_i32_0 : i32, i32
  }
  func.func @transform_4(%arg0: i32) -> (i32, i32) {
    %c0_i32 = arith.constant 0 : i32
    %c0_i32_0 = arith.constant 0 : i32
    %c0_i32_1 = arith.constant 0 : i32
    return %c0_i32, %c0_i32_0 : i32, i32
  }
  func.func @transform_5(%arg0: i32) -> (i32, i32, i32, i32) {
    %c0_i32 = arith.constant 0 : i32
    %c0_i32_0 = arith.constant 0 : i32
    %c0_i32_1 = arith.constant 0 : i32
    %c0_i32_2 = arith.constant 0 : i32
    return %arg0, %c0_i32, %c0_i32_0, %c0_i32_1 : i32, i32, i32, i32
  }
}

</mosaic_0001>

<llo_original>
// kernel: feature_recalibration.1
$region0: #{feature_recalibration.1}
  #allocation0 [shape = 'u32[]', space=smem, size = 0x4, offset = 0x4, fixed_abs, tag = 'smem constant byte address 0x4 - core index']
  #allocation1 [shape = 'u32[144,128]{1,0:T(1,128)}', space=vmem, size = 0x12000, scoped, tag = 'internal scratch']
  #allocation2 [shape = 'f32[4,128]{1,0:T(4,128)}', space=vmem, size = 0x800, scoped, tag = 'scratch operand']
  %s0 = inlined_call_operand.vmem [shape: f32[2,4,32,128], index: 0, kind: input, shape index: {}]
  %s1 = inlined_call_operand.vmem [shape: f32[2,4], index: 1, kind: input, shape index: {}]
  %s2 = inlined_call_operand.vmem [shape: f32[2,1], index: 2, kind: input, shape index: {}]
  %s3 = inlined_call_operand.vmem [shape: f32[4,2], index: 3, kind: input, shape index: {}]
  %s4 = inlined_call_operand.vmem [shape: f32[4,1], index: 4, kind: input, shape index: {}]
  %s5 = inlined_call_operand.vmem [shape: f32[2,4,32,128], index: 5, kind: output, shape index: {}]
  %s6 = sld [smem:[#allocation0]]
  $region53: #{feature_recalibration.1} parent=0
    _
  %s8 = ssub.s32 1, %s6
  %s9 = scalar_select 0, %s8, %s6
  loop: start=0, step=1, limit=4
  $region2: #{feature_recalibration.1} parent=0 // loop_pre_header
    _
  $region3: #{feature_recalibration.1} parent=0 // loop_header
    %s11 = sphi 0, %s15
    %p12 = scmp.ge.s32.totalorder %s11, 4
    %s21 = sphi 0, %s23
    %s24 = sphi 0, %s21
    %s25 = sphi 0, %s24
    %s41 = sphi 0, %s25
    %s45 = sphi 0, %s45
    %s47 = sphi 0, %s45
    %s48 = sphi 0, %s47
    %s62 = sphi 0, %s48
    %s66 = sphi 0, %s66
    %s68 = sphi 0, %s66
    %s69 = sphi 0, %s68
    %s83 = sphi 0, %s69
    %s87 = sphi 0, %s87
    %s89 = sphi 0, %s87
    %s90 = sphi 0, %s89
    %s104 = sphi 0, %s90
    %s108 = sphi 0, %s108
    %s110 = sphi 0, %s108
    %s111 = sphi 0, %s110
    %s125 = sphi 0, %s111
    %s131 = sphi 0, %s133
    %s134 = sphi 0, %s131
    %s135 = sphi 0, %s134
    %s151 = sphi 0, %s135
  $region4: #{feature_recalibration.1} parent=0 // loop_header_branch
    %14 = sbr.rel (%p12) target = $region8
  $region5: #{feature_recalibration.1} parent=0 // loop_body
    %s16 = ssub.s32 %s11, 1
    %s17 = ssub.s32 %s11, 2
    %s18 = sadd.s32 %s11, 1
    %s19 = ssub.s32 %s11, %s18
    %p20 = scmp.eq.s32.totalorder %s19, 0
    %s22 = sadd.s32 %s21, 1
    %s23 = scalar_select %p20, %s21, %s22
    %p26 = pneg %p20
    %p27 = scmp.eq.s32.totalorder %s11, 1
    %p28 = por %p26, %p27
    %p29 = scmp.ne.s32.totalorder %s21, %s24
    %p30 = scmp.eq.s32.totalorder %s11, 0
    %p31 = por %p29, %p30
    %p32 = scmp.ne.s32.totalorder %s21, %s24
    %p33 = scmp.eq.s32.totalorder %s16, 1
    %p34 = por %p32, %p33
    %p35 = scmp.ne.s32.totalorder %s24, %s25
    %p36 = scmp.eq.s32.totalorder %s16, 0
    %p37 = por %p35, %p36
    %p38 = scmp.ne.s32.totalorder %s24, %s25
    %p39 = scmp.eq.s32.totalorder %s17, 1
    %p40 = por %p38, %p39
    %p42 = scmp.ne.s32.totalorder %s25, %s41
    %p43 = scmp.eq.s32.totalorder %s17, 0
    %p44 = por %p42, %p43
    %s46 = sadd.s32 %s45, 1
    %p49 = scmp.eq.s32.totalorder %s11, 1
    %p50 = scmp.ne.s32.totalorder %s45, %s47
    %p51 = scmp.eq.s32.totalorder %s11, 0
    %p52 = por %p50, %p51
    %p53 = scmp.ne.s32.totalorder %s45, %s47
    %p54 = scmp.eq.s32.totalorder %s16, 1
    %p55 = por %p53, %p54
    %p56 = scmp.ne.s32.totalorder %s47, %s48
    %p57 = scmp.eq.s32.totalorder %s16, 0
    %p58 = por %p56, %p57
    %p59 = scmp.ne.s32.totalorder %s47, %s48
    %p60 = scmp.eq.s32.totalorder %s17, 1
    %p61 = por %p59, %p60
    %p63 = scmp.ne.s32.totalorder %s48, %s62
    %p64 = scmp.eq.s32.totalorder %s17, 0
    %p65 = por %p63, %p64
    %s67 = sadd.s32 %s66, 1
    %p70 = scmp.eq.s32.totalorder %s11, 1
    %p71 = scmp.ne.s32.totalorder %s66, %s68
    %p72 = scmp.eq.s32.totalorder %s11, 0
    %p73 = por %p71, %p72
    %p74 = scmp.ne.s32.totalorder %s66, %s68
    %p75 = scmp.eq.s32.totalorder %s16, 1
    %p76 = por %p74, %p75
    %p77 = scmp.ne.s32.totalorder %s68, %s69
    %p78 = scmp.eq.s32.totalorder %s16, 0
    %p79 = por %p77, %p78
    %p80 = scmp.ne.s32.totalorder %s68, %s69
    %p81 = scmp.eq.s32.totalorder %s17, 1
    %p82 = por %p80, %p81
    %p84 = scmp.ne.s32.totalorder %s69, %s83
    %p85 = scmp.eq.s32.totalorder %s17, 0
    %p86 = por %p84, %p85
    %s88 = sadd.s32 %s87, 1
    %p91 = scmp.eq.s32.totalorder %s11, 1
    %p92 = scmp.ne.s32.totalorder %s87, %s89
    %p93 = scmp.eq.s32.totalorder %s11, 0
    %p94 = por %p92, %p93
    %p95 = scmp.ne.s32.totalorder %s87, %s89
    %p96 = scmp.eq.s32.totalorder %s16, 1
    %p97 = por %p95, %p96
    %p98 = scmp.ne.s32.totalorder %s89, %s90
    %p99 = scmp.eq.s32.totalorder %s16, 0
    %p100 = por %p98, %p99
    %p101 = scmp.ne.s32.totalorder %s89, %s90
    %p102 = scmp.eq.s32.totalorder %s17, 1
    %p103 = por %p101, %p102
    %p105 = scmp.ne.s32.totalorder %s90, %s104
    %p106 = scmp.eq.s32.totalorder %s17, 0
    %p107 = por %p105, %p106
    %s109 = sadd.s32 %s108, 1
    %p112 = scmp.eq.s32.totalorder %s11, 1
    %p113 = scmp.ne.s32.totalorder %s108, %s110
    %p114 = scmp.eq.s32.totalorder %s11, 0
    %p115 = por %p113, %p114
    %p116 = scmp.ne.s32.totalorder %s108, %s110
    %p117 = scmp.eq.s32.totalorder %s16, 1
    %p118 = por %p116, %p117
    %p119 = scmp.ne.s32.totalorder %s110, %s111
    %p120 = scmp.eq.s32.totalorder %s16, 0
    %p121 = por %p119, %p120
    %p122 = scmp.ne.s32.totalorder %s110, %s111
    %p123 = scmp.eq.s32.totalorder %s17, 1
    %p124 = por %p122, %p123
    %p126 = scmp.ne.s32.totalorder %s111, %s125
    %p127 = scmp.eq.s32.totalorder %s17, 0
    %p128 = por %p126, %p127
    %s129 = ssub.s32 %s11, %s18
    %p130 = scmp.eq.s32.totalorder %s129, 0
    %s132 = sadd.s32 %s131, 1
    %s133 = scalar_select %p130, %s131, %s132
    %p136 = pneg %p130
    %p137 = scmp.eq.s32.totalorder %s11, 1
    %p138 = por %p136, %p137
    %p139 = scmp.ne.s32.totalorder %s131, %s134
    %p140 = scmp.eq.s32.totalorder %s11, 0
    %p141 = por %p139, %p140
    %p142 = scmp.ne.s32.totalorder %s131, %s134
    %p143 = scmp.eq.s32.totalorder %s16, 1
    %p144 = por %p142, %p143
    %p145 = scmp.ne.s32.totalorder %s134, %s135
    %p146 = scmp.eq.s32.totalorder %s16, 0
    %p147 = por %p145, %p146
    %p148 = scmp.ne.s32.totalorder %s134, %s135
    %p149 = scmp.eq.s32.totalorder %s17, 1
    %p150 = por %p148, %p149
    %p152 = scmp.ne.s32.totalorder %s135, %s151
    %p153 = scmp.eq.s32.totalorder %s17, 0
    %p154 = por %p152, %p153
    %p155 = scmp.le.s32.totalorder 1, %s11
    %p156 = scmp.lt.s32.totalorder %s11, 3
    %p157 = pnand %p155, %p156
    %p158 = pneg %p157
    // Predicated region
    $region9: #{feature_recalibration.1} parent=5 // pred_check
      _
    $region10: #{feature_recalibration.1} parent=5 // pred_check_branch
      %160 = sbr.rel (%p157) target = $region12
    $region11: #{feature_recalibration.1} parent=5 // pred_region
      %s161 = ssub.s32 %s11, 1
      // Predicated region
      $region13: #{feature_recalibration.1} parent=11 // pred_check
        %p162 = pneg %p58
      $region14: #{feature_recalibration.1} parent=11 // pred_check_branch
        %164 = sbr.rel (%p162) target = $region16
      $region15: #{feature_recalibration.1} parent=11 // pred_region
        _
      $region16: #{feature_recalibration.1} parent=11 // pred_fallthru
        _
      // Predicated region
      $region17: #{feature_recalibration.1} parent=11 // pred_check
        %p165 = pneg %p79
      $region18: #{feature_recalibration.1} parent=11 // pred_check_branch
        %167 = sbr.rel (%p165) target = $region20
      $region19: #{feature_recalibration.1} parent=11 // pred_region
        _
      $region20: #{feature_recalibration.1} parent=11 // pred_fallthru
        _
      // Predicated region
      $region21: #{feature_recalibration.1} parent=11 // pred_check
        %p168 = pneg %p100
      $region22: #{feature_recalibration.1} parent=11 // pred_check_branch
        %170 = sbr.rel (%p168) target = $region24
      $region23: #{feature_recalibration.1} parent=11 // pred_region
        _
      $region24: #{feature_recalibration.1} parent=11 // pred_fallthru
        _
      // Predicated region
      $region25: #{feature_recalibration.1} parent=11 // pred_check
        %p171 = pneg %p121
      $region26: #{feature_recalibration.1} parent=11 // pred_check_branch
        %173 = sbr.rel (%p171) target = $region28
      $region27: #{feature_recalibration.1} parent=11 // pred_region
        _
      $region28: #{feature_recalibration.1} parent=11 // pred_fallthru
        _
    $region12: #{feature_recalibration.1} parent=5 // pred_fallthru
      _
    %p174 = scmp.lt.s32.totalorder %s11, 2
    // Predicated region
    $region29: #{feature_recalibration.1} parent=5 // pred_check
      %p175 = pneg %p174
    $region30: #{feature_recalibration.1} parent=5 // pred_check_branch
      %177 = sbr.rel (%p175) target = $region32
    $region31: #{feature_recalibration.1} parent=5 // pred_region
      // Predicated region
      $region33: #{feature_recalibration.1} parent=31 // pred_check
        %p178 = pneg %p31
      $region34: #{feature_recalibration.1} parent=31 // pred_check_branch
        %180 = sbr.rel (%p178) target = $region36
      $region35: #{feature_recalibration.1} parent=31 // pred_region
        %p181 = scmp.lt.s32.totalorder %s11, 1
        %s182 = scalar_select %p181, %s11, 1
        %s183 = smul.addr %s182, 16
        %s184 = smul.addr %s183, 8
        %s185 = scalar_lea.vmem %s0, %s184
      $region36: #{feature_recalibration.1} parent=31 // pred_fallthru
        _
    $region32: #{feature_recalibration.1} parent=5 // pred_fallthru
      _
    %p186 = scmp.le.s32.totalorder 1, %s11
    %p187 = scmp.lt.s32.totalorder %s11, 3
    %p188 = pnand %p186, %p187
    %p189 = pneg %p188
    // Predicated region
    $region37: #{feature_recalibration.1} parent=5 // pred_check
      _
    $region38: #{feature_recalibration.1} parent=5 // pred_check_branch
      %191 = sbr.rel (%p188) target = $region40
    $region39: #{feature_recalibration.1} parent=5 // pred_region
      %s192 = ssub.s32 %s11, 1
      %p193 = scmp.lt.s32.totalorder %s16, 1
      %s194 = scalar_select %p193, %s16, 1
      %s195 = smul.addr %s194, 16
      %s196 = smul.addr %s195, 8
      %s197 = scalar_lea.vmem %s0, %s196
      %p198 = pneg %p37
      %p199 = pneg %p34
      %p200 = pneg %p58
      %p201 = pneg %p55
      %p202 = pneg %p79
      %p203 = pneg %p76
      %p204 = pneg %p100
      %p205 = pneg %p97
      %p206 = pneg %p121
      %p207 = pneg %p118
      %p208 = pneg %p147
      %p209 = pneg %p144
      %p210 = scmp.lt.s32.totalorder %s16, 1
      %s211 = scalar_select %p210, %s16, 1
      %s212 = smul.addr %s211, 16
      %s213 = smul.addr %s212, 8
      %s214 = scalar_lea.vmem %s5, %s213
      %p215 = scmp.lt.s32.totalorder %s16, 1
      %s216 = scalar_select %p215, %s16, 1
      %s217 = smul.addr %s216, 16
      %s218 = smul.addr %s217, 8
      %s219 = scalar_lea.vmem %s0, %s218
      %p220 = scmp.lt.s32.totalorder %s16, 1
      %s221 = scalar_select %p220, %s16, 1
      %s222 = smul.addr %s221, 16
      %s223 = smul.addr %s222, 8
      %s224 = scalar_lea.vmem %s5, %s223
      %225 = vst [vmem:[#allocation2] sm:$0xf] 0.0
      %v226 = vld [vmem:[%s219] sm:$0xff]
      %v227 = vld [vmem:[%s219 + $0x8] sm:$0xff]
      %v228 = vld [vmem:[%s219 + $0x10] sm:$0xff]
      %v229 = vld [vmem:[%s219 + $0x18] sm:$0xff]
      %v230 = vld [vmem:[%s219 + $0x20] sm:$0xff]
      %v231 = vld [vmem:[%s219 + $0x28] sm:$0xff]
      %v232 = vld [vmem:[%s219 + $0x30] sm:$0xff]
      %v233 = vld [vmem:[%s219 + $0x38] sm:$0xff]
      %v234 = vld [vmem:[%s219 + $0x40] sm:$0xff]
      %v235 = vld [vmem:[%s219 + $0x48] sm:$0xff]
      %v236 = vld [vmem:[%s219 + $0x50] sm:$0xff]
      %v237 = vld [vmem:[%s219 + $0x58] sm:$0xff]
      %v238 = vld [vmem:[%s219 + $0x60] sm:$0xff]
      %v239 = vld [vmem:[%s219 + $0x68] sm:$0xff]
      %v240 = vld [vmem:[%s219 + $0x70] sm:$0xff]
      %v241 = vld [vmem:[%s219 + $0x78] sm:$0xff]
      %v242 = vld [vmem:[#allocation2] sm:$0xf]
      %v243 = vadd.f32 %v226, %v227
      %v244 = vadd.f32 %v243, %v228
      %v245 = vadd.f32 %v244, %v229
      %v246 = vrot.slane %v245, 4
      %v247 = vadd.f32 %v245, %v246
      %v248 = vrot.slane %v247, 2
      %v249 = vadd.f32 %v247, %v248
      %v250 = vrot.slane %v249, 1
      %v251 = vadd.f32 %v249, %v250
      %v252 = vadd.f32 %v230, %v231
      %v253 = vadd.f32 %v252, %v232
      %v254 = vadd.f32 %v253, %v233
      %v255 = vrot.slane %v254, 4
      %v256 = vadd.f32 %v254, %v255
      %v257 = vrot.slane %v256, 2
      %v258 = vadd.f32 %v256, %v257
      %v259 = vrot.slane %v258, 1
      %v260 = vadd.f32 %v258, %v259
      %v261 = vadd.f32 %v234, %v235
      %v262 = vadd.f32 %v261, %v236
      %v263 = vadd.f32 %v262, %v237
      %v264 = vrot.slane %v263, 4
      %v265 = vadd.f32 %v263, %v264
      %v266 = vrot.slane %v265, 2
      %v267 = vadd.f32 %v265, %v266
      %v268 = vrot.slane %v267, 1
      %v269 = vadd.f32 %v267, %v268
      %v270 = vadd.f32 %v238, %v239
      %v271 = vadd.f32 %v270, %v240
      %v272 = vadd.f32 %v271, %v241
      %v273 = vrot.slane %v272, 4
      %v274 = vadd.f32 %v272, %v273
      %v275 = vrot.slane %v274, 2
      %v276 = vadd.f32 %v274, %v275
      %v277 = vrot.slane %v276, 1
      %v278 = vadd.f32 %v276, %v277
      %vm283 = vcmask 1041409
      %v284 = vsel %vm283, %v260, %v251
      %vm285 = vcmask 1042434
      %v286 = vsel %vm285, %v269, %v284
      %vm287 = vcmask 1043459
      %v288 = vsel %vm287, %v278, %v286
      %v290 = vadd.f32 %v242, %v288
      %291 = vst [vmem:[#allocation2] sm:$0xf] %v290
      %v292 = vld [vmem:[#allocation2] sm:$0xf]
      %vm293 = vcmask 1043456
      %v294 = vsel %vm293, %v292, 0.0
      %295 = vadd.xlane.f32.xlu0 %v294
      %v296 = vpop.xlane.xlu0 %295
      %v297 = vmul.f32 %v296, 0.00024414063
      %v298 = vld [vmem:[%s1] sm:$0x3]
      %v299 = vld [vmem:[%s2] sm:$0x3]
      %v300 = vld [vmem:[%s3] sm:$0xf]
      %v301 = vld [vmem:[%s4] sm:$0xf]
      %302 = vxpose.xlu0.b32.start [1/16] %v297, 128
      %303 = vxpose.xlu0.b32.cont [2/16] 0.0, 128
      %304 = vxpose.xlu0.b32.cont [3/16] 0.0, 128
      %305 = vxpose.xlu0.b32.cont [4/16] 0.0, 128
      %306 = vxpose.xlu0.b32.cont [5/16] 0.0, 128
      %307 = vxpose.xlu0.b32.cont [6/16] 0.0, 128
      %308 = vxpose.xlu0.b32.cont [7/16] 0.0, 128
      %309 = vxpose.xlu0.b32.cont [8/16] 0.0, 128
      %310 = vxpose.xlu0.b32.cont [9/16] 0.0, 128
      %311 = vxpose.xlu0.b32.cont [10/16] 0.0, 128
      %312 = vxpose.xlu0.b32.cont [11/16] 0.0, 128
      %313 = vxpose.xlu0.b32.cont [12/16] 0.0, 128
      %314 = vxpose.xlu0.b32.cont [13/16] 0.0, 128
      %315 = vxpose.xlu0.b32.cont [14/16] 0.0, 128
      %316 = vxpose.xlu0.b32.cont [15/16] 0.0, 128
      %317 = vxpose.xlu0.b32.end [16/16] 0.0, 128
      %v318 = vpop.trf.xlu0
      %v319 = vpop.trf.xlu0
      %v320 = vpop.trf.xlu0
      %v321 = vpop.trf.xlu0
      %v322 = vpop.trf.xlu0
      %v323 = vpop.trf.xlu0
      %v324 = vpop.trf.xlu0
      %v325 = vpop.trf.xlu0
      %v326 = vpop.trf.xlu0
      %v327 = vpop.trf.xlu0
      %v328 = vpop.trf.xlu0
      %v329 = vpop.trf.xlu0
      %v330 = vpop.trf.xlu0
      %v331 = vpop.trf.xlu0
      %v332 = vpop.trf.xlu0
      %v333 = vpop.trf.xlu0
      %v334 = vlaneseq
      %v335 = vshrl.u32 %v334, 7
      %v336 = vsub.s32 0, %v335
      %v337 = vrot.slane %v318, %v336
      %v338 = vmul.f32 %v298, %v337
      %vm339 = vcmask 25600
      %v340 = vsel %vm339, %v338, 0.0
      %341 = vadd.xlane.f32.xlu0 %v340
      %v342 = vpop.xlane.xlu0 %341
      %v343 = vadd.f32 %v342, %v299
      %v344 = vmax.f32 %v343, 0.0
      %345 = vxpose.xlu0.b32.start [1/16] %v344, 128
      %346 = vxpose.xlu0.b32.cont [2/16] 0.0, 128
      %347 = vxpose.xlu0.b32.cont [3/16] 0.0, 128
      %348 = vxpose.xlu0.b32.cont [4/16] 0.0, 128
      %349 = vxpose.xlu0.b32.cont [5/16] 0.0, 128
      %350 = vxpose.xlu0.b32.cont [6/16] 0.0, 128
      %351 = vxpose.xlu0.b32.cont [7/16] 0.0, 128
      %352 = vxpose.xlu0.b32.cont [8/16] 0.0, 128
      %353 = vxpose.xlu0.b32.cont [9/16] 0.0, 128
      %354 = vxpose.xlu0.b32.cont [10/16] 0.0, 128
      %355 = vxpose.xlu0.b32.cont [11/16] 0.0, 128
      %356 = vxpose.xlu0.b32.cont [12/16] 0.0, 128
      %357 = vxpose.xlu0.b32.cont [13/16] 0.0, 128
      %358 = vxpose.xlu0.b32.cont [14/16] 0.0, 128
      %359 = vxpose.xlu0.b32.cont [15/16] 0.0, 128
      %360 = vxpose.xlu0.b32.end [16/16] 0.0, 128
      %v361 = vpop.trf.xlu0
      %v362 = vpop.trf.xlu0
      %v363 = vpop.trf.xlu0
      %v364 = vpop.trf.xlu0
      %v365 = vpop.trf.xlu0
      %v366 = vpop.trf.xlu0
      %v367 = vpop.trf.xlu0
      %v368 = vpop.trf.xlu0
      %v369 = vpop.trf.xlu0
      %v370 = vpop.trf.xlu0
      %v371 = vpop.trf.xlu0
      %v372 = vpop.trf.xlu0
      %v373 = vpop.trf.xlu0
      %v374 = vpop.trf.xlu0
      %v375 = vpop.trf.xlu0
      %v376 = vpop.trf.xlu0
      %v377 = vlaneseq
      %v378 = vshrl.u32 %v377, 7
      %v379 = vsub.s32 0, %v378
      %v380 = vrot.slane %v361, %v379
      %v381 = vmul.f32 %v300, %v380
      %vm382 = vcmask 11264
      %v383 = vsel %vm382, %v381, 0.0
      %384 = vadd.xlane.f32.xlu0 %v383
      %v385 = vpop.xlane.xlu0 %384
      %v386 = vadd.f32 %v385, %v301
      %v387 = vxor.u32 %v386, 2147483648
      %v388 = vmul.f32 %v387, 1.442695
      %v389 = vpow.pop %v388
      %v390 = vadd.f32 %v389, 1.0
      %v391 = vrcp.pop %v390
      %v392 = vmul.f32 1.0, %v391
      %v393 = vld [vmem:[%s219] sm:$0xff]
      %v394 = vld [vmem:[%s219 + $0x8] sm:$0xff]
      %v395 = vld [vmem:[%s219 + $0x10] sm:$0xff]
      %v396 = vld [vmem:[%s219 + $0x18] sm:$0xff]
      %v397 = vld [vmem:[%s219 + $0x20] sm:$0xff]
      %v398 = vld [vmem:[%s219 + $0x28] sm:$0xff]
      %v399 = vld [vmem:[%s219 + $0x30] sm:$0xff]
      %v400 = vld [vmem:[%s219 + $0x38] sm:$0xff]
      %v401 = vld [vmem:[%s219 + $0x40] sm:$0xff]
      %v402 = vld [vmem:[%s219 + $0x48] sm:$0xff]
      %v403 = vld [vmem:[%s219 + $0x50] sm:$0xff]
      %v404 = vld [vmem:[%s219 + $0x58] sm:$0xff]
      %v405 = vld [vmem:[%s219 + $0x60] sm:$0xff]
      %v406 = vld [vmem:[%s219 + $0x68] sm:$0xff]
      %v407 = vld [vmem:[%s219 + $0x70] sm:$0xff]
      %v408 = vld [vmem:[%s219 + $0x78] sm:$0xff]
      %v411 = vunpack.c.l.s4 1966171168
      %v412 = vunpack.c.0.s8 %v411
      %v413 = vlaneseq
      %v414 = vshrl.u32 %v413, 7
      %v415 = vsub.s32 %v412, %v414
      %v416 = vrot.slane %v392, %v415
      %v417 = vcombine.high %v416, %v416
      %v419 = vunpack.c.l.s4 1966171168
      %v420 = vunpack.c.0.s8 %v419
      %v421 = vlaneseq
      %v422 = vshrl.u32 %v421, 7
      %v423 = vsub.s32 %v420, %v422
      %v424 = vrot.slane %v416, %v423
      %v426 = vunpack.c.l.s4 1966171168
      %v427 = vunpack.c.0.s8 %v426
      %v428 = vlaneseq
      %v429 = vshrl.u32 %v428, 7
      %v430 = vsub.s32 %v427, %v429
      %v431 = vrot.slane %v417, %v430
      %v432 = vcombine.high %v424, %v424
      %v433 = vcombine.high %v431, %v431
      %v434 = vlaneseq
      %v435 = vshrl.u32 %v434, 7
      %v436 = vsub.s32 0, %v435
      %v437 = vrot.slane %v424, %v436
      %v438 = vlaneseq
      %v439 = vshrl.u32 %v438, 7
      %v440 = vsub.s32 0, %v439
      %v441 = vrot.slane %v431, %v440
      %v442 = vlaneseq
      %v443 = vshrl.u32 %v442, 7
      %v444 = vsub.s32 0, %v443
      %v445 = vrot.slane %v432, %v444
      %v446 = vlaneseq
      %v447 = vshrl.u32 %v446, 7
      %v448 = vsub.s32 0, %v447
      %v449 = vrot.slane %v433, %v448
      %450 = vset.pattern.permute.xlu0 0
      %451 = vperm.xlu0 %450, %v437
      %v452 = vpop.permute.xlu0 %451
      %454 = vset.pattern.permute.xlu0 0
      %455 = vperm.xlu0 %454, %v441
      %v456 = vpop.permute.xlu0 %455
      %458 = vset.pattern.permute.xlu0 0
      %459 = vperm.xlu0 %458, %v445
      %v460 = vpop.permute.xlu0 %459
      %462 = vset.pattern.permute.xlu0 0
      %463 = vperm.xlu0 %462, %v449
      %v464 = vpop.permute.xlu0 %463
      %v466 = vmul.f32 %v393, %v452
      %v467 = vmul.f32 %v394, %v452
      %v468 = vmul.f32 %v395, %v452
      %v469 = vmul.f32 %v396, %v452
      %v470 = vmul.f32 %v397, %v456
      %v471 = vmul.f32 %v398, %v456
      %v472 = vmul.f32 %v399, %v456
      %v473 = vmul.f32 %v400, %v456
      %v474 = vmul.f32 %v401, %v460
      %v475 = vmul.f32 %v402, %v460
      %v476 = vmul.f32 %v403, %v460
      %v477 = vmul.f32 %v404, %v460
      %v478 = vmul.f32 %v405, %v464
      %v479 = vmul.f32 %v406, %v464
      %v480 = vmul.f32 %v407, %v464
      %v481 = vmul.f32 %v408, %v464
      %482 = vst [vmem:[%s224] sm:$0xff] %v466
      %483 = vst [vmem:[%s224 + $0x8] sm:$0xff] %v467
      %484 = vst [vmem:[%s224 + $0x10] sm:$0xff] %v468
      %485 = vst [vmem:[%s224 + $0x18] sm:$0xff] %v469
      %486 = vst [vmem:[%s224 + $0x20] sm:$0xff] %v470
      %487 = vst [vmem:[%s224 + $0x28] sm:$0xff] %v471
      %488 = vst [vmem:[%s224 + $0x30] sm:$0xff] %v472
      %489 = vst [vmem:[%s224 + $0x38] sm:$0xff] %v473
      %490 = vst [vmem:[%s224 + $0x40] sm:$0xff] %v474
      %491 = vst [vmem:[%s224 + $0x48] sm:$0xff] %v475
      %492 = vst [vmem:[%s224 + $0x50] sm:$0xff] %v476
      %493 = vst [vmem:[%s224 + $0x58] sm:$0xff] %v477
      %494 = vst [vmem:[%s224 + $0x60] sm:$0xff] %v478
      %495 = vst [vmem:[%s224 + $0x68] sm:$0xff] %v479
      %496 = vst [vmem:[%s224 + $0x70] sm:$0xff] %v480
      %497 = vst [vmem:[%s224 + $0x78] sm:$0xff] %v481
      %p498 = scmp.lt.s32.totalorder %s16, 1
      %s499 = scalar_select %p498, %s16, 1
      %s500 = smul.addr %s499, 16
      %s501 = smul.addr %s500, 8
      %s502 = scalar_lea.vmem %s5, %s501
      // Predicated region
      $region41: #{feature_recalibration.1} parent=39 // pred_check
        %p503 = pneg %p144
      $region42: #{feature_recalibration.1} parent=39 // pred_check_branch
        %505 = sbr.rel (%p503) target = $region44
      $region43: #{feature_recalibration.1} parent=39 // pred_region
        _
      $region44: #{feature_recalibration.1} parent=39 // pred_fallthru
        _
    $region40: #{feature_recalibration.1} parent=5 // pred_fallthru
      _
    %p506 = scmp.le.s32.totalorder 2, %s11
    // Predicated region
    $region45: #{feature_recalibration.1} parent=5 // pred_check
      %p507 = pneg %p506
    $region46: #{feature_recalibration.1} parent=5 // pred_check_branch
      %509 = sbr.rel (%p507) target = $region48
    $region47: #{feature_recalibration.1} parent=5 // pred_region
      %s510 = ssub.s32 %s11, 2
      // Predicated region
      $region49: #{feature_recalibration.1} parent=47 // pred_check
        %p511 = pneg %p150
      $region50: #{feature_recalibration.1} parent=47 // pred_check_branch
        %513 = sbr.rel (%p511) target = $region52
      $region51: #{feature_recalibration.1} parent=47 // pred_region
        %p514 = scmp.lt.s32.totalorder %s17, 1
        %s515 = scalar_select %p514, %s17, 1
        %s516 = smul.addr %s515, 16
        %s517 = smul.addr %s516, 8
        %s518 = scalar_lea.vmem %s5, %s517
      $region52: #{feature_recalibration.1} parent=47 // pred_fallthru
        _
    $region48: #{feature_recalibration.1} parent=5 // pred_fallthru
      _
  $region6: #{feature_recalibration.1} parent=0 // loop_footer
    %s15 = sadd.s32 1, %s11
  $region7: #{feature_recalibration.1} parent=0 // loop_footer_branch
    %10 = sbr.rel target = $region3
  $region8: #{feature_recalibration.1} parent=0 // loop_exit
    _

</llo_original>
